<compile_context>
chip_gen: v7x
topology: tpu7x:2x2x1
jax: 0.10.0
libtpu: 0.0.40
codegen_flags: <defaults>
</compile_context>

<pallas_src>
import jax
import jax.numpy as jnp
from jax.experimental import pallas as pl
from jax.experimental.pallas import tpu as pltpu

LANES = 128            # TPU lane width
TARGET_TILE_B = 4096   # large-batch tile: amortizes ~0.35us/step, fits v5e scoped VMEM


def mlp_kernel(xT_ref, w1T_ref, b1_ref, w2_ref, b2_ref, o_ref):
    # Layer 1 on the MXU: (256, 20) bf16 @ (20, tile_b) bf16 -> (256, tile_b) f32.
    h = jnp.dot(w1T_ref[...], xT_ref[...], preferred_element_type=jnp.float32)
    # Bias + ReLU on the VPU; b1 broadcasts as a (256, 1) column over the lanes.
    h = jnp.maximum(h + b1_ref[...], 0.0)
    # Layer 2: VPU multiply by the (256, 1) w2 column, then a sublane-axis reduction
    # (vreg-vreg VALU adds + a small in-vreg fold).  Result is (1, tile_b): lane-dense
    # by construction, so the store is an unmasked full-row vst.
    y = jnp.sum(h * w2_ref[...], axis=0, keepdims=True) + b2_ref[0, 0]
    o_ref[...] = y.astype(o_ref.dtype)


def _round_up(n, m):
    return ((n + m - 1) // m) * m


def _pick_tile_b(batch):
    """Batch-adaptive tile: tiny batches don't pad up to a huge tile, mid-size batches
    get >= 2 grid tiles (so v7x's two TensorCores both get work), and large batches are
    capped at TARGET_TILE_B to stay inside v5e's 16 MiB scoped-VMEM default."""
    if batch <= LANES:
        return LANES
    two_way = _round_up(pl.cdiv(batch, 2), LANES)
    return min(TARGET_TILE_B, two_way)


def mlp_forward(x, w1, b1, w2, b2, *, tile_b=None):
    """Forward pass of Linear(20,256) -> ReLU -> Linear(256,1).

    x:  (B, 20) f32
    w1: (20, 256), b1: (1, 256)   (hidden layer, weight stored as (in, out))
    w2: (256, 1),  b2: (1, 1)     (output layer)
    Returns (B, 1) f32, matching the PyTorch module.
    """
    B, in_dim = x.shape
    hid = w1.shape[1]
    if tile_b is None:
        tile_b = _pick_tile_b(B)
    assert tile_b % LANES == 0, "tile_b must be a multiple of 128"

    bp = pl.cdiv(B, tile_b) * tile_b
    g = bp // tile_b

    # x fed pre-transposed & pre-cast: (in_dim, Bp) bf16, batch on lanes (lane-dense).
    xT = jnp.pad(x, ((0, bp - B), (0, 0))).T.astype(jnp.bfloat16)

    # One-time tiny parameter reshapes/casts on the host side of the call.
    w1T = w1.T.astype(jnp.bfloat16)     # (256, 20) bf16 MXU operand
    b1_col = b1.reshape(hid, 1)         # (256, 1) f32 bias column
    w2_col = w2.reshape(hid, 1)         # (256, 1) f32 layer-2 weight column
    b2_s = b2.reshape(1, 1)             # scalar -> SMEM

    cost = pl.CostEstimate(
        flops=2 * bp * in_dim * hid + 4 * bp * hid,
        transcendentals=0,
        bytes_accessed=bp * in_dim * 2 + bp * 4 + hid * in_dim * 2 + 2 * hid * 4 + 4,
    )

    out = pl.pallas_call(
        mlp_kernel,
        out_shape=jax.ShapeDtypeStruct((1, bp), jnp.float32),
        grid=(g,),
        in_specs=[
            # xT: one (20, tile_b) batch tile per grid step (double-buffered by Pallas).
            pl.BlockSpec((in_dim, tile_b), lambda i: (0, i)),
            # Weights/biases: full-array blocks, constant index map -> stay resident.
            pl.BlockSpec((hid, in_dim), lambda i: (0, 0)),
            pl.BlockSpec((hid, 1), lambda i: (0, 0)),
            pl.BlockSpec((hid, 1), lambda i: (0, 0)),
            # b2: scalar on the SMEM/scalar path (no padded VMEM tile).
            pl.BlockSpec(memory_space=pltpu.MemorySpace.SMEM),
        ],
        # Lane-dense (1, tile_b) output rows, last dim a multiple of 128.
        out_specs=pl.BlockSpec((1, tile_b), lambda i: (0, i)),
        compiler_params=pltpu.CompilerParams(
            dimension_semantics=("parallel",),  # lets v7x shard batch tiles over 2 TCs
        ),
        cost_estimate=cost,
    )(xT, w1T, b1_col, w2_col, b2_s)

    # (1, Bp) lane-dense row -> (B, 1) column, matching nn.Linear output layout.
    return out.reshape(bp, 1)[:B]


def init_params(key, in_dim=20, hidden_dim=256, out_dim=1):
    # Deterministic init matching nn.Linear(20,256) / nn.Linear(256,1) shapes.
    # PyTorch Linear computes x @ W.T + b with W (out, in); we store W pre-transposed
    # to (in, out) so the reference is a plain matmul (the kernel transposes again).
    k1, k2, k3, k4 = jax.random.split(key, 4)
    bound1 = 1.0 / jnp.sqrt(in_dim)
    bound2 = 1.0 / jnp.sqrt(hidden_dim)
    w1 = jax.random.uniform(k1, (in_dim, hidden_dim), jnp.float32, -bound1, bound1)
    b1 = jax.random.uniform(k2, (1, hidden_dim), jnp.float32, -bound1, bound1)
    w2 = jax.random.uniform(k3, (hidden_dim, out_dim), jnp.float32, -bound2, bound2)
    b2 = jax.random.uniform(k4, (1, out_dim), jnp.float32, -bound2, bound2)
    return w1, b1, w2, b2


if __name__ == "__main__":
    key = jax.random.PRNGKey(0)
    kx, kp = jax.random.split(key)

    # Matches the module: X = torch.rand(2, 20)
    x = jax.random.uniform(kx, (2, 20), jnp.float32)
    w1, b1, w2, b2 = init_params(kp)

    out = mlp_forward(x, w1, b1, w2, b2)
    out = jax.block_until_ready(out)

    # Reference in f32; layer-1 operands run in bf16 on the MXU, so use a loose tolerance.
    ref = jnp.maximum(x @ w1 + b1, 0.0) @ w2 + b2
    assert out.shape == (2, 1)
    assert jnp.allclose(out, ref, atol=2e-2, rtol=2e-2), (out, ref)

    print("KERNEL_OK")
</pallas_src>

<mosaic_0001>
module attributes {stable_mosaic.version = 11 : i64} {
  func.func @mlp_kernel(%arg0: i32, %arg1: memref<20x128xbf16, #tpu.memory_space<vmem>>, %arg2: memref<256x20xbf16, #tpu.memory_space<vmem>>, %arg3: memref<256x1xf32, #tpu.memory_space<vmem>>, %arg4: memref<256x1xf32, #tpu.memory_space<vmem>>, %arg5: memref<1x1xf32, #tpu.memory_space<smem>>, %arg6: memref<1x128xf32, #tpu.memory_space<vmem>>) attributes {dimension_semantics = [#tpu.dimension_semantics<parallel>], iteration_bounds = array<i64: 1>, scalar_prefetch = 0 : i64, scratch_operands = 0 : i64, tpu.core_type = #tpu.core_type<tc>, window_params = [{transform_indices = @transform_0, window_bounds = array<i64: 20, 128>}, {pipeline_mode = #tpu.pipeline_mode<synchronous>, transform_indices = @transform_1, window_bounds = array<i64: 256, 20>}, {pipeline_mode = #tpu.pipeline_mode<synchronous>, transform_indices = @transform_2, window_bounds = array<i64: 256, 1>}, {pipeline_mode = #tpu.pipeline_mode<synchronous>, transform_indices = @transform_3, window_bounds = array<i64: 256, 1>}, {transform_indices = @transform_4, window_bounds = array<i64: 1, 1>}, {transform_indices = @transform_5, window_bounds = array<i64: 1, 128>}]} {
    %c0 = arith.constant 0 : index
    %c0_0 = arith.constant 0 : index
    %0 = vector.load %arg2[%c0, %c0_0] : memref<256x20xbf16, #tpu.memory_space<vmem>>, vector<256x20xbf16>
    %c0_1 = arith.constant 0 : index
    %c0_2 = arith.constant 0 : index
    %1 = vector.load %arg1[%c0_1, %c0_2] : memref<20x128xbf16, #tpu.memory_space<vmem>>, vector<20x128xbf16>
    %cst = arith.constant dense<0.000000e+00> : vector<256x128xf32>
    %2 = tpu.matmul %0, %1, %cst {dimension_numbers = #tpu.dot_dimension_numbers<[1], [0], [0], [1], [0, 0, 1, 1], [], []>} : vector<256x20xbf16>, vector<20x128xbf16>, vector<256x128xf32> -> vector<256x128xf32>
    %c0_3 = arith.constant 0 : index
    %c0_4 = arith.constant 0 : index
    %3 = vector.load %arg3[%c0_3, %c0_4] : memref<256x1xf32, #tpu.memory_space<vmem>>, vector<256x1xf32>
    %4 = vector.broadcast %3 : vector<256x1xf32> to vector<256x128xf32>
    %5 = arith.addf %2, %4 : vector<256x128xf32>
    %cst_5 = arith.constant 0.000000e+00 : f32
    %6 = vector.broadcast %cst_5 : f32 to vector<256x128xf32>
    %7 = arith.maximumf %5, %6 : vector<256x128xf32>
    %c0_6 = arith.constant 0 : index
    %c0_7 = arith.constant 0 : index
    %8 = vector.load %arg4[%c0_6, %c0_7] : memref<256x1xf32, #tpu.memory_space<vmem>>, vector<256x1xf32>
    %9 = vector.broadcast %8 : vector<256x1xf32> to vector<256x128xf32>
    %10 = arith.mulf %7, %9 : vector<256x128xf32>
    %cst_8 = arith.constant dense<0.000000e+00> : vector<128xf32>
    %11 = vector.multi_reduction <add>, %10, %cst_8 [0] : vector<256x128xf32> to vector<128xf32>
    %12 = vector.shape_cast %11 : vector<128xf32> to vector<1x128xf32>
    %c0_9 = arith.constant 0 : index
    %c0_10 = arith.constant 0 : index
    %13 = memref.load %arg5[%c0_9, %c0_10] : memref<1x1xf32, #tpu.memory_space<smem>>
    %14 = vector.broadcast %13 : f32 to vector<1x128xf32>
    %15 = arith.addf %12, %14 : vector<1x128xf32>
    %c0_11 = arith.constant 0 : index
    %c0_12 = arith.constant 0 : index
    %16 = vector.load %arg6[%c0_11, %c0_12] : memref<1x128xf32, #tpu.memory_space<vmem>>, vector<1x128xf32>
    tpu.vector_store %arg6[%c0_11, %c0_12], %15 {strides = array<i32>} : memref<1x128xf32, #tpu.memory_space<vmem>>, vector<1x128xf32>,
    return
  }
  func.func @transform_0(%arg0: i32) -> (i32, i32) {
    %c0_i32 = arith.constant 0 : i32
    %c0_i32_0 = arith.constant 0 : i32
    return %c0_i32, %arg0 : i32, i32
  }
  func.func @transform_1(%arg0: i32) -> (i32, i32) {
    %c0_i32 = arith.constant 0 : i32
    %c0_i32_0 = arith.constant 0 : i32
    %c0_i32_1 = arith.constant 0 : i32
    return %c0_i32, %c0_i32_0 : i32, i32
  }
  func.func @transform_2(%arg0: i32) -> (i32, i32) {
    %c0_i32 = arith.constant 0 : i32
    %c0_i32_0 = arith.constant 0 : i32
    %c0_i32_1 = arith.constant 0 : i32
    return %c0_i32, %c0_i32_0 : i32, i32
  }
  func.func @transform_3(%arg0: i32) -> (i32, i32) {
    %c0_i32 = arith.constant 0 : i32
    %c0_i32_0 = arith.constant 0 : i32
    %c0_i32_1 = arith.constant 0 : i32
    return %c0_i32, %c0_i32_0 : i32, i32
  }
  func.func @transform_4(%arg0: i32) -> (i32, i32) {
    %c0_i32 = arith.constant 0 : i32
    %c0_i32_0 = arith.constant 0 : i32
    %c0_i32_1 = arith.constant 0 : i32
    return %c0_i32, %c0_i32_0 : i32, i32
  }
  func.func @transform_5(%arg0: i32) -> (i32, i32) {
    %c0_i32 = arith.constant 0 : i32
    %c0_i32_0 = arith.constant 0 : i32
    return %c0_i32, %arg0 : i32, i32
  }
}

</mosaic_0001>

<llo_original>
// kernel: tpu_custom_call.1
$region0: #{tpu_custom_call.1}
  #allocation0 [shape = 'u32[]', space=smem, size = 0x4, offset = 0x4, fixed_abs, tag = 'smem constant byte address 0x4 - core index']
  #allocation1 [shape = 'u32[144,128]{1,0:T(1,128)}', space=vmem, size = 0x12000, scoped, tag = 'internal scratch']
  #allocation2 [shape = 'f32[1,1]{1,0:T(1,128)S(6)}', space=smem, size = 0x200, scoped, tag = 'scoped memory for tpu_custom_call.1']
  %s0 = inlined_call_operand.vmem [shape: bf16[20,128], index: 0, kind: input, shape index: {}]
  %s1 = inlined_call_operand.vmem [shape: bf16[256,20], index: 1, kind: input, shape index: {}]
  %s2 = inlined_call_operand.vmem [shape: f32[256,1], index: 2, kind: input, shape index: {}]
  %s3 = inlined_call_operand.vmem [shape: f32[256,1], index: 3, kind: input, shape index: {}]
  %s4 = inlined_call_operand.<no memory space> [shape: f32[1,1], index: 4, kind: input, shape index: {}]
  %s5 = inlined_call_operand.hbm [shape: f32[1,128], index: 5, kind: output, shape index: {}]
  %s6 = sld [smem:[#allocation0]]
  $region30: #{tpu_custom_call.1} parent=0
    _
  %s8 = ssub.s32 1, %s6
  %s9 = scalar_select 0, %s8, %s6
  %10 = sst [smem:[#allocation2]] %s4
  $region1: #{tpu_custom_call.1} parent=0
    #allocation3 [shape = 'u8[512]{0}', space=vmem, size = 0x400, scoped, tag = 'output window, operand 0, single buffered']
    #allocation4 [shape = 's32[1]{0}', space=sflag, size = 0x4, scoped, tag = 'scoped memory for tpu_custom_call.1']
    %11 = vsyncpa [#allocation4], 0
    // Predicated region
    $region2: #{tpu_custom_call.1} parent=1 // pred_check
      _
    $region3: #{tpu_custom_call.1} parent=1 // pred_check_branch
      %13 = sbr.rel (0) target = $region5
    $region4: #{tpu_custom_call.1} parent=1 // pred_region
      _
    $region5: #{tpu_custom_call.1} parent=1 // pred_fallthru
      _
    // Predicated region
    $region6: #{tpu_custom_call.1} parent=1 // pred_check
      _
    $region7: #{tpu_custom_call.1} parent=1 // pred_check_branch
      %15 = sbr.rel (0) target = $region9
    $region8: #{tpu_custom_call.1} parent=1 // pred_region
      _
    $region9: #{tpu_custom_call.1} parent=1 // pred_fallthru
      _
    // Predicated region
    $region10: #{tpu_custom_call.1} parent=1 // pred_check
      _
    $region11: #{tpu_custom_call.1} parent=1 // pred_check_branch
      %17 = sbr.rel (0) target = $region13
    $region12: #{tpu_custom_call.1} parent=1 // pred_region
      _
    $region13: #{tpu_custom_call.1} parent=1 // pred_fallthru
      _
    // Predicated region
    $region14: #{tpu_custom_call.1} parent=1 // pred_check
      _
    $region15: #{tpu_custom_call.1} parent=1 // pred_check_branch
      %19 = sbr.rel (0) target = $region17
    $region16: #{tpu_custom_call.1} parent=1 // pred_region
      _
    $region17: #{tpu_custom_call.1} parent=1 // pred_fallthru
      _
    // Predicated region
    $region18: #{tpu_custom_call.1} parent=1 // pred_check
      _
    $region19: #{tpu_custom_call.1} parent=1 // pred_check_branch
      %21 = sbr.rel (0) target = $region21
    $region20: #{tpu_custom_call.1} parent=1 // pred_region
      _
    $region21: #{tpu_custom_call.1} parent=1 // pred_fallthru
      _
    %v23 = vld [vmem:[%s1] sm:$0xf]
    %v24 = vld [vmem:[%s1 + $0x4] sm:$0xf]
    %v25 = vld [vmem:[%s1 + $0x8] sm:$0xf]
    %v26 = vld [vmem:[%s1 + $0xc] sm:$0xf]
    %v27 = vld [vmem:[%s1 + $0x10] sm:$0xf]
    %v28 = vld [vmem:[%s1 + $0x14] sm:$0xf]
    %v29 = vld [vmem:[%s1 + $0x18] sm:$0xf]
    %v30 = vld [vmem:[%s1 + $0x1c] sm:$0xf]
    %v31 = vld [vmem:[%s1 + $0x20] sm:$0xf]
    %v32 = vld [vmem:[%s1 + $0x24] sm:$0xf]
    %v33 = vld [vmem:[%s1 + $0x28] sm:$0xf]
    %v34 = vld [vmem:[%s1 + $0x2c] sm:$0xf]
    %v35 = vld [vmem:[%s1 + $0x30] sm:$0xf]
    %v36 = vld [vmem:[%s1 + $0x34] sm:$0xf]
    %v37 = vld [vmem:[%s1 + $0x38] sm:$0xf]
    %v38 = vld [vmem:[%s1 + $0x3c] sm:$0xf]
    %v39 = vld [vmem:[%s1 + $0x40] sm:$0xf]
    %v40 = vld [vmem:[%s1 + $0x44] sm:$0xf]
    %v41 = vld [vmem:[%s1 + $0x48] sm:$0xf]
    %v42 = vld [vmem:[%s1 + $0x4c] sm:$0xf]
    %v43 = vld [vmem:[%s1 + $0x50] sm:$0xf]
    %v44 = vld [vmem:[%s1 + $0x54] sm:$0xf]
    %v45 = vld [vmem:[%s1 + $0x58] sm:$0xf]
    %v46 = vld [vmem:[%s1 + $0x5c] sm:$0xf]
    %v47 = vld [vmem:[%s1 + $0x60] sm:$0xf]
    %v48 = vld [vmem:[%s1 + $0x64] sm:$0xf]
    %v49 = vld [vmem:[%s1 + $0x68] sm:$0xf]
    %v50 = vld [vmem:[%s1 + $0x6c] sm:$0xf]
    %v51 = vld [vmem:[%s1 + $0x70] sm:$0xf]
    %v52 = vld [vmem:[%s1 + $0x74] sm:$0xf]
    %v53 = vld [vmem:[%s1 + $0x78] sm:$0xf]
    %v54 = vld [vmem:[%s1 + $0x7c] sm:$0xf]
    %v55 = vld [vmem:[%s0] sm:$0xf]
    %v56 = vld [vmem:[%s0 + $0x4] sm:$0xf]
    %v57 = vld [vmem:[%s0 + $0x8] sm:$0x3]
    %v58 = vld [vmem:[%s2] sm:$0xff]
    %v59 = vld [vmem:[%s2 + $0x8] sm:$0xff]
    %v60 = vld [vmem:[%s2 + $0x10] sm:$0xff]
    %v61 = vld [vmem:[%s2 + $0x18] sm:$0xff]
    %v62 = vld [vmem:[%s2 + $0x20] sm:$0xff]
    %v63 = vld [vmem:[%s2 + $0x28] sm:$0xff]
    %v64 = vld [vmem:[%s2 + $0x30] sm:$0xff]
    %v65 = vld [vmem:[%s2 + $0x38] sm:$0xff]
    %v66 = vld [vmem:[%s2 + $0x40] sm:$0xff]
    %v67 = vld [vmem:[%s2 + $0x48] sm:$0xff]
    %v68 = vld [vmem:[%s2 + $0x50] sm:$0xff]
    %v69 = vld [vmem:[%s2 + $0x58] sm:$0xff]
    %v70 = vld [vmem:[%s2 + $0x60] sm:$0xff]
    %v71 = vld [vmem:[%s2 + $0x68] sm:$0xff]
    %v72 = vld [vmem:[%s2 + $0x70] sm:$0xff]
    %v73 = vld [vmem:[%s2 + $0x78] sm:$0xff]
    %v74 = vld [vmem:[%s2 + $0x80] sm:$0xff]
    %v75 = vld [vmem:[%s2 + $0x88] sm:$0xff]
    %v76 = vld [vmem:[%s2 + $0x90] sm:$0xff]
    %v77 = vld [vmem:[%s2 + $0x98] sm:$0xff]
    %v78 = vld [vmem:[%s2 + $0xa0] sm:$0xff]
    %v79 = vld [vmem:[%s2 + $0xa8] sm:$0xff]
    %v80 = vld [vmem:[%s2 + $0xb0] sm:$0xff]
    %v81 = vld [vmem:[%s2 + $0xb8] sm:$0xff]
    %v82 = vld [vmem:[%s2 + $0xc0] sm:$0xff]
    %v83 = vld [vmem:[%s2 + $0xc8] sm:$0xff]
    %v84 = vld [vmem:[%s2 + $0xd0] sm:$0xff]
    %v85 = vld [vmem:[%s2 + $0xd8] sm:$0xff]
    %v86 = vld [vmem:[%s2 + $0xe0] sm:$0xff]
    %v87 = vld [vmem:[%s2 + $0xe8] sm:$0xff]
    %v88 = vld [vmem:[%s2 + $0xf0] sm:$0xff]
    %v89 = vld [vmem:[%s2 + $0xf8] sm:$0xff]
    %91 = vset.pattern.permute.xlu0 0
    %92 = vperm.xlu0 %91, %v58
    %v93 = vpop.permute.xlu0 %92
    %96 = vset.pattern.permute.xlu0 0
    %97 = vperm.xlu0 %96, %v59
    %v98 = vpop.permute.xlu0 %97
    %101 = vset.pattern.permute.xlu0 0
    %102 = vperm.xlu0 %101, %v60
    %v103 = vpop.permute.xlu0 %102
    %106 = vset.pattern.permute.xlu0 0
    %107 = vperm.xlu0 %106, %v61
    %v108 = vpop.permute.xlu0 %107
    %111 = vset.pattern.permute.xlu0 0
    %112 = vperm.xlu0 %111, %v62
    %v113 = vpop.permute.xlu0 %112
    %116 = vset.pattern.permute.xlu0 0
    %117 = vperm.xlu0 %116, %v63
    %v118 = vpop.permute.xlu0 %117
    %121 = vset.pattern.permute.xlu0 0
    %122 = vperm.xlu0 %121, %v64
    %v123 = vpop.permute.xlu0 %122
    %126 = vset.pattern.permute.xlu0 0
    %127 = vperm.xlu0 %126, %v65
    %v128 = vpop.permute.xlu0 %127
    %131 = vset.pattern.permute.xlu0 0
    %132 = vperm.xlu0 %131, %v66
    %v133 = vpop.permute.xlu0 %132
    %136 = vset.pattern.permute.xlu0 0
    %137 = vperm.xlu0 %136, %v67
    %v138 = vpop.permute.xlu0 %137
    %141 = vset.pattern.permute.xlu0 0
    %142 = vperm.xlu0 %141, %v68
    %v143 = vpop.permute.xlu0 %142
    %146 = vset.pattern.permute.xlu0 0
    %147 = vperm.xlu0 %146, %v69
    %v148 = vpop.permute.xlu0 %147
    %151 = vset.pattern.permute.xlu0 0
    %152 = vperm.xlu0 %151, %v70
    %v153 = vpop.permute.xlu0 %152
    %156 = vset.pattern.permute.xlu0 0
    %157 = vperm.xlu0 %156, %v71
    %v158 = vpop.permute.xlu0 %157
    %161 = vset.pattern.permute.xlu0 0
    %162 = vperm.xlu0 %161, %v72
    %v163 = vpop.permute.xlu0 %162
    %166 = vset.pattern.permute.xlu0 0
    %167 = vperm.xlu0 %166, %v73
    %v168 = vpop.permute.xlu0 %167
    %171 = vset.pattern.permute.xlu0 0
    %172 = vperm.xlu0 %171, %v74
    %v173 = vpop.permute.xlu0 %172
    %176 = vset.pattern.permute.xlu0 0
    %177 = vperm.xlu0 %176, %v75
    %v178 = vpop.permute.xlu0 %177
    %181 = vset.pattern.permute.xlu0 0
    %182 = vperm.xlu0 %181, %v76
    %v183 = vpop.permute.xlu0 %182
    %186 = vset.pattern.permute.xlu0 0
    %187 = vperm.xlu0 %186, %v77
    %v188 = vpop.permute.xlu0 %187
    %191 = vset.pattern.permute.xlu0 0
    %192 = vperm.xlu0 %191, %v78
    %v193 = vpop.permute.xlu0 %192
    %196 = vset.pattern.permute.xlu0 0
    %197 = vperm.xlu0 %196, %v79
    %v198 = vpop.permute.xlu0 %197
    %201 = vset.pattern.permute.xlu0 0
    %202 = vperm.xlu0 %201, %v80
    %v203 = vpop.permute.xlu0 %202
    %206 = vset.pattern.permute.xlu0 0
    %207 = vperm.xlu0 %206, %v81
    %v208 = vpop.permute.xlu0 %207
    %211 = vset.pattern.permute.xlu0 0
    %212 = vperm.xlu0 %211, %v82
    %v213 = vpop.permute.xlu0 %212
    %216 = vset.pattern.permute.xlu0 0
    %217 = vperm.xlu0 %216, %v83
    %v218 = vpop.permute.xlu0 %217
    %221 = vset.pattern.permute.xlu0 0
    %222 = vperm.xlu0 %221, %v84
    %v223 = vpop.permute.xlu0 %222
    %226 = vset.pattern.permute.xlu0 0
    %227 = vperm.xlu0 %226, %v85
    %v228 = vpop.permute.xlu0 %227
    %231 = vset.pattern.permute.xlu0 0
    %232 = vperm.xlu0 %231, %v86
    %v233 = vpop.permute.xlu0 %232
    %236 = vset.pattern.permute.xlu0 0
    %237 = vperm.xlu0 %236, %v87
    %v238 = vpop.permute.xlu0 %237
    %241 = vset.pattern.permute.xlu0 0
    %242 = vperm.xlu0 %241, %v88
    %v243 = vpop.permute.xlu0 %242
    %246 = vset.pattern.permute.xlu0 0
    %247 = vperm.xlu0 %246, %v89
    %v248 = vpop.permute.xlu0 %247
    %v282 = vunpack.c.l.b16 %v23
    %v283 = vunpack.c.l.b16 %v24
    %v284 = vunpack.c.l.b16 %v25
    %v285 = vunpack.c.l.b16 %v26
    %v286 = vunpack.c.l.b16 %v27
    %v287 = vunpack.c.l.b16 %v28
    %v288 = vunpack.c.l.b16 %v29
    %v289 = vunpack.c.l.b16 %v30
    %v290 = vunpack.c.l.b16 %v31
    %v291 = vunpack.c.l.b16 %v32
    %v292 = vunpack.c.l.b16 %v33
    %v293 = vunpack.c.l.b16 %v34
    %v294 = vunpack.c.l.b16 %v35
    %v295 = vunpack.c.l.b16 %v36
    %v296 = vunpack.c.l.b16 %v37
    %v297 = vunpack.c.l.b16 %v38
    %v298 = vunpack.c.l.b16 %v39
    %v299 = vunpack.c.l.b16 %v40
    %v300 = vunpack.c.l.b16 %v41
    %v301 = vunpack.c.l.b16 %v42
    %v302 = vunpack.c.l.b16 %v43
    %v303 = vunpack.c.l.b16 %v44
    %v304 = vunpack.c.l.b16 %v45
    %v305 = vunpack.c.l.b16 %v46
    %v306 = vunpack.c.l.b16 %v47
    %v307 = vunpack.c.l.b16 %v48
    %v308 = vunpack.c.l.b16 %v49
    %v309 = vunpack.c.l.b16 %v50
    %v310 = vunpack.c.l.b16 %v51
    %v311 = vunpack.c.l.b16 %v52
    %v312 = vunpack.c.l.b16 %v53
    %v313 = vunpack.c.l.b16 %v54
    %v314 = vpack.c.b16 %v283, %v282
    %v315 = vpack.c.b16 %v285, %v284
    %v316 = vpack.c.b16 %v287, %v286
    %v317 = vpack.c.b16 %v289, %v288
    %v318 = vpack.c.b16 %v291, %v290
    %v319 = vpack.c.b16 %v293, %v292
    %v320 = vpack.c.b16 %v295, %v294
    %v321 = vpack.c.b16 %v297, %v296
    %v322 = vpack.c.b16 %v299, %v298
    %v323 = vpack.c.b16 %v301, %v300
    %v324 = vpack.c.b16 %v303, %v302
    %v325 = vpack.c.b16 %v305, %v304
    %v326 = vpack.c.b16 %v307, %v306
    %v327 = vpack.c.b16 %v309, %v308
    %v328 = vpack.c.b16 %v311, %v310
    %v329 = vpack.c.b16 %v313, %v312
    %v333 = vunpack.c.l.b16 %v55
    %v334 = vunpack.c.l.b16 %v56
    %v335 = vunpack.c.l.b16 %v57
    %v336 = vpack.c.b16 %v334, %v333
    %v337 = vpack.c.b16 %v335, %v335
    %vm339 = vcmask 162816
    %v341 = vsel %vm339, %v314, 0
    %v344 = vsel %vm339, %v315, 0
    %v347 = vsel %vm339, %v316, 0
    %v350 = vsel %vm339, %v317, 0
    %v353 = vsel %vm339, %v318, 0
    %v356 = vsel %vm339, %v319, 0
    %v359 = vsel %vm339, %v320, 0
    %v362 = vsel %vm339, %v321, 0
    %v365 = vsel %vm339, %v322, 0
    %v368 = vsel %vm339, %v323, 0
    %v371 = vsel %vm339, %v324, 0
    %v374 = vsel %vm339, %v325, 0
    %v377 = vsel %vm339, %v326, 0
    %v380 = vsel %vm339, %v327, 0
    %v383 = vsel %vm339, %v328, 0
    %v386 = vsel %vm339, %v329, 0
    %vm388 = vcmask 1041408
    %v390 = vsel %vm388, %v337, 0
    %392 = vmatprep.subr.bf16.mxu0 0
    %393 = vmatpush1.bf16.msra.mxu0 %v336
    %394 = vmatprep.subr.bf16.mxu0 0
    %395 = vmatpush1.bf16.msra.mxu0 %v390
    %396 = vmatprep.subr.bf16.mxu0 0
    %397 = vmatpush1.bf16.msra.mxu0 0
    %398 = vmatprep.subr.bf16.mxu0 0
    %399 = vmatpush1.bf16.msra.mxu0 0
    %400 = vmatprep.subr.bf16.mxu0 0
    %401 = vmatpush1.bf16.msra.mxu0 0
    %402 = vmatprep.subr.bf16.mxu0 0
    %403 = vmatpush1.bf16.msra.mxu0 0
    %404 = vmatprep.subr.bf16.mxu0 0
    %405 = vmatpush1.bf16.msra.mxu0 0
    %406 = vmatprep.subr.bf16.mxu0 0
    %407 = vmatpush1.bf16.msra.mxu0 0
    %408 = vmatprep.subr.bf16.mxu0 0
    %409 = vmatpush1.bf16.msra.mxu0 0
    %410 = vmatprep.subr.bf16.mxu0 0
    %411 = vmatpush1.bf16.msra.mxu0 0
    %412 = vmatprep.subr.bf16.mxu0 0
    %413 = vmatpush1.bf16.msra.mxu0 0
    %414 = vmatprep.subr.bf16.mxu0 0
    %415 = vmatpush1.bf16.msra.mxu0 0
    %416 = vmatprep.subr.bf16.mxu0 0
    %417 = vmatpush1.bf16.msra.mxu0 0
    %418 = vmatprep.subr.bf16.mxu0 0
    %419 = vmatpush1.bf16.msra.mxu0 0
    %420 = vmatprep.subr.bf16.mxu0 0
    %421 = vmatpush1.bf16.msra.mxu0 0
    %422 = vmatprep.subr.bf16.mxu0 0
    %423 = vmatpush1.bf16.msra.mxu0 0
    %424 = vmatprep.mubr.bf16.mxu0 0
    %425 = vmatmul.mubr.bf16.gmra.mrb[0].mxu0 %v341
    %v426 = vpop.f32.mrb[0].mxu0
    %v427 = vadd.f32 %v93, %v426
    %v428 = vpop.f32.mrb[0].mxu0
    %v429 = vpop.f32.mrb[0].mxu0
    %v430 = vadd.f32 %v98, %v429
    %v431 = vpop.f32.mrb[0].mxu0
    %432 = vmatprep.mubr.bf16.mxu0 0
    %433 = vmatmul.mubr.bf16.gmra.mrb[0].mxu0 %v344
    %v434 = vpop.f32.mrb[0].mxu0
    %v435 = vadd.f32 %v103, %v434
    %v436 = vpop.f32.mrb[0].mxu0
    %v437 = vpop.f32.mrb[0].mxu0
    %v438 = vadd.f32 %v108, %v437
    %v439 = vpop.f32.mrb[0].mxu0
    %440 = vmatprep.mubr.bf16.mxu0 0
    %441 = vmatmul.mubr.bf16.gmra.mrb[0].mxu0 %v347
    %v442 = vpop.f32.mrb[0].mxu0
    %v443 = vadd.f32 %v113, %v442
    %v444 = vpop.f32.mrb[0].mxu0
    %v445 = vpop.f32.mrb[0].mxu0
    %v446 = vadd.f32 %v118, %v445
    %v447 = vpop.f32.mrb[0].mxu0
    %448 = vmatprep.mubr.bf16.mxu0 0
    %449 = vmatmul.mubr.bf16.gmra.mrb[0].mxu0 %v350
    %v450 = vpop.f32.mrb[0].mxu0
    %v451 = vadd.f32 %v123, %v450
    %v452 = vpop.f32.mrb[0].mxu0
    %v453 = vpop.f32.mrb[0].mxu0
    %v454 = vadd.f32 %v128, %v453
    %v455 = vpop.f32.mrb[0].mxu0
    %456 = vmatprep.mubr.bf16.mxu0 0
    %457 = vmatmul.mubr.bf16.gmra.mrb[0].mxu0 %v353
    %v458 = vpop.f32.mrb[0].mxu0
    %v459 = vadd.f32 %v133, %v458
    %v460 = vpop.f32.mrb[0].mxu0
    %v461 = vpop.f32.mrb[0].mxu0
    %v462 = vadd.f32 %v138, %v461
    %v463 = vpop.f32.mrb[0].mxu0
    %464 = vmatprep.mubr.bf16.mxu0 0
    %465 = vmatmul.mubr.bf16.gmra.mrb[0].mxu0 %v356
    %v466 = vpop.f32.mrb[0].mxu0
    %v467 = vadd.f32 %v143, %v466
    %v468 = vpop.f32.mrb[0].mxu0
    %v469 = vpop.f32.mrb[0].mxu0
    %v470 = vadd.f32 %v148, %v469
    %v471 = vpop.f32.mrb[0].mxu0
    %472 = vmatprep.mubr.bf16.mxu0 0
    %473 = vmatmul.mubr.bf16.gmra.mrb[0].mxu0 %v359
    %v474 = vpop.f32.mrb[0].mxu0
    %v475 = vadd.f32 %v153, %v474
    %v476 = vpop.f32.mrb[0].mxu0
    %v477 = vpop.f32.mrb[0].mxu0
    %v478 = vadd.f32 %v158, %v477
    %v479 = vpop.f32.mrb[0].mxu0
    %480 = vmatprep.mubr.bf16.mxu0 0
    %481 = vmatmul.mubr.bf16.gmra.mrb[0].mxu0 %v362
    %v482 = vpop.f32.mrb[0].mxu0
    %v483 = vadd.f32 %v163, %v482
    %v484 = vpop.f32.mrb[0].mxu0
    %v485 = vpop.f32.mrb[0].mxu0
    %v486 = vadd.f32 %v168, %v485
    %v487 = vpop.f32.mrb[0].mxu0
    %488 = vmatprep.mubr.bf16.mxu0 0
    %489 = vmatmul.mubr.bf16.gmra.mrb[0].mxu0 %v365
    %v490 = vpop.f32.mrb[0].mxu0
    %v491 = vadd.f32 %v173, %v490
    %v492 = vpop.f32.mrb[0].mxu0
    %v493 = vpop.f32.mrb[0].mxu0
    %v494 = vadd.f32 %v178, %v493
    %v495 = vpop.f32.mrb[0].mxu0
    %496 = vmatprep.mubr.bf16.mxu0 0
    %497 = vmatmul.mubr.bf16.gmra.mrb[0].mxu0 %v368
    %v498 = vpop.f32.mrb[0].mxu0
    %v499 = vadd.f32 %v183, %v498
    %v500 = vpop.f32.mrb[0].mxu0
    %v501 = vpop.f32.mrb[0].mxu0
    %v502 = vadd.f32 %v188, %v501
    %v503 = vpop.f32.mrb[0].mxu0
    %504 = vmatprep.mubr.bf16.mxu0 0
    %505 = vmatmul.mubr.bf16.gmra.mrb[0].mxu0 %v371
    %v506 = vpop.f32.mrb[0].mxu0
    %v507 = vadd.f32 %v193, %v506
    %v508 = vpop.f32.mrb[0].mxu0
    %v509 = vpop.f32.mrb[0].mxu0
    %v510 = vadd.f32 %v198, %v509
    %v511 = vpop.f32.mrb[0].mxu0
    %512 = vmatprep.mubr.bf16.mxu0 0
    %513 = vmatmul.mubr.bf16.gmra.mrb[0].mxu0 %v374
    %v514 = vpop.f32.mrb[0].mxu0
    %v515 = vadd.f32 %v203, %v514
    %v516 = vpop.f32.mrb[0].mxu0
    %v517 = vpop.f32.mrb[0].mxu0
    %v518 = vadd.f32 %v208, %v517
    %v519 = vpop.f32.mrb[0].mxu0
    %520 = vmatprep.mubr.bf16.mxu0 0
    %521 = vmatmul.mubr.bf16.gmra.mrb[0].mxu0 %v377
    %v522 = vpop.f32.mrb[0].mxu0
    %v523 = vadd.f32 %v213, %v522
    %v524 = vpop.f32.mrb[0].mxu0
    %v525 = vpop.f32.mrb[0].mxu0
    %v526 = vadd.f32 %v218, %v525
    %v527 = vpop.f32.mrb[0].mxu0
    %528 = vmatprep.mubr.bf16.mxu0 0
    %529 = vmatmul.mubr.bf16.gmra.mrb[0].mxu0 %v380
    %v530 = vpop.f32.mrb[0].mxu0
    %v531 = vadd.f32 %v223, %v530
    %v532 = vpop.f32.mrb[0].mxu0
    %v533 = vpop.f32.mrb[0].mxu0
    %v534 = vadd.f32 %v228, %v533
    %v535 = vpop.f32.mrb[0].mxu0
    %536 = vmatprep.mubr.bf16.mxu0 0
    %537 = vmatmul.mubr.bf16.gmra.mrb[0].mxu0 %v383
    %v538 = vpop.f32.mrb[0].mxu0
    %v539 = vadd.f32 %v233, %v538
    %v540 = vpop.f32.mrb[0].mxu0
    %v541 = vpop.f32.mrb[0].mxu0
    %v542 = vadd.f32 %v238, %v541
    %v543 = vpop.f32.mrb[0].mxu0
    %544 = vmatprep.mubr.bf16.mxu0 0
    %545 = vmatmul.mubr.bf16.gmra.mrb[0].mxu0 %v386
    %v546 = vpop.f32.mrb[0].mxu0
    %v547 = vadd.f32 %v243, %v546
    %v548 = vpop.f32.mrb[0].mxu0
    %v549 = vpop.f32.mrb[0].mxu0
    %v550 = vadd.f32 %v248, %v549
    %v551 = vpop.f32.mrb[0].mxu0
    %552 = vdwg.mxu0
    %v553 = vmax.f32 %v427, 0.0
    %v554 = vmax.f32 %v430, 0.0
    %v555 = vmax.f32 %v435, 0.0
    %v556 = vmax.f32 %v438, 0.0
    %v557 = vmax.f32 %v443, 0.0
    %v558 = vmax.f32 %v446, 0.0
    %v559 = vmax.f32 %v451, 0.0
    %v560 = vmax.f32 %v454, 0.0
    %v561 = vmax.f32 %v459, 0.0
    %v562 = vmax.f32 %v462, 0.0
    %v563 = vmax.f32 %v467, 0.0
    %v564 = vmax.f32 %v470, 0.0
    %v565 = vmax.f32 %v475, 0.0
    %v566 = vmax.f32 %v478, 0.0
    %v567 = vmax.f32 %v483, 0.0
    %v568 = vmax.f32 %v486, 0.0
    %v569 = vmax.f32 %v491, 0.0
    %v570 = vmax.f32 %v494, 0.0
    %v571 = vmax.f32 %v499, 0.0
    %v572 = vmax.f32 %v502, 0.0
    %v573 = vmax.f32 %v507, 0.0
    %v574 = vmax.f32 %v510, 0.0
    %v575 = vmax.f32 %v515, 0.0
    %v576 = vmax.f32 %v518, 0.0
    %v577 = vmax.f32 %v523, 0.0
    %v578 = vmax.f32 %v526, 0.0
    %v579 = vmax.f32 %v531, 0.0
    %v580 = vmax.f32 %v534, 0.0
    %v581 = vmax.f32 %v539, 0.0
    %v582 = vmax.f32 %v542, 0.0
    %v583 = vmax.f32 %v547, 0.0
    %v584 = vmax.f32 %v550, 0.0
    %v585 = vld [vmem:[%s3] sm:$0xff]
    %v586 = vld [vmem:[%s3 + $0x8] sm:$0xff]
    %v587 = vld [vmem:[%s3 + $0x10] sm:$0xff]
    %v588 = vld [vmem:[%s3 + $0x18] sm:$0xff]
    %v589 = vld [vmem:[%s3 + $0x20] sm:$0xff]
    %v590 = vld [vmem:[%s3 + $0x28] sm:$0xff]
    %v591 = vld [vmem:[%s3 + $0x30] sm:$0xff]
    %v592 = vld [vmem:[%s3 + $0x38] sm:$0xff]
    %v593 = vld [vmem:[%s3 + $0x40] sm:$0xff]
    %v594 = vld [vmem:[%s3 + $0x48] sm:$0xff]
    %v595 = vld [vmem:[%s3 + $0x50] sm:$0xff]
    %v596 = vld [vmem:[%s3 + $0x58] sm:$0xff]
    %v597 = vld [vmem:[%s3 + $0x60] sm:$0xff]
    %v598 = vld [vmem:[%s3 + $0x68] sm:$0xff]
    %v599 = vld [vmem:[%s3 + $0x70] sm:$0xff]
    %v600 = vld [vmem:[%s3 + $0x78] sm:$0xff]
    %v601 = vld [vmem:[%s3 + $0x80] sm:$0xff]
    %v602 = vld [vmem:[%s3 + $0x88] sm:$0xff]
    %v603 = vld [vmem:[%s3 + $0x90] sm:$0xff]
    %v604 = vld [vmem:[%s3 + $0x98] sm:$0xff]
    %v605 = vld [vmem:[%s3 + $0xa0] sm:$0xff]
    %v606 = vld [vmem:[%s3 + $0xa8] sm:$0xff]
    %v607 = vld [vmem:[%s3 + $0xb0] sm:$0xff]
    %v608 = vld [vmem:[%s3 + $0xb8] sm:$0xff]
    %v609 = vld [vmem:[%s3 + $0xc0] sm:$0xff]
    %v610 = vld [vmem:[%s3 + $0xc8] sm:$0xff]
    %v611 = vld [vmem:[%s3 + $0xd0] sm:$0xff]
    %v612 = vld [vmem:[%s3 + $0xd8] sm:$0xff]
    %v613 = vld [vmem:[%s3 + $0xe0] sm:$0xff]
    %v614 = vld [vmem:[%s3 + $0xe8] sm:$0xff]
    %v615 = vld [vmem:[%s3 + $0xf0] sm:$0xff]
    %v616 = vld [vmem:[%s3 + $0xf8] sm:$0xff]
    %618 = vset.pattern.permute.xlu0 0
    %619 = vperm.xlu0 %618, %v585
    %v620 = vpop.permute.xlu0 %619
    %623 = vset.pattern.permute.xlu0 0
    %624 = vperm.xlu0 %623, %v586
    %v625 = vpop.permute.xlu0 %624
    %628 = vset.pattern.permute.xlu0 0
    %629 = vperm.xlu0 %628, %v587
    %v630 = vpop.permute.xlu0 %629
    %633 = vset.pattern.permute.xlu0 0
    %634 = vperm.xlu0 %633, %v588
    %v635 = vpop.permute.xlu0 %634
    %638 = vset.pattern.permute.xlu0 0
    %639 = vperm.xlu0 %638, %v589
    %v640 = vpop.permute.xlu0 %639
    %643 = vset.pattern.permute.xlu0 0
    %644 = vperm.xlu0 %643, %v590
    %v645 = vpop.permute.xlu0 %644
    %648 = vset.pattern.permute.xlu0 0
    %649 = vperm.xlu0 %648, %v591
    %v650 = vpop.permute.xlu0 %649
    %653 = vset.pattern.permute.xlu0 0
    %654 = vperm.xlu0 %653, %v592
    %v655 = vpop.permute.xlu0 %654
    %658 = vset.pattern.permute.xlu0 0
    %659 = vperm.xlu0 %658, %v593
    %v660 = vpop.permute.xlu0 %659
    %663 = vset.pattern.permute.xlu0 0
    %664 = vperm.xlu0 %663, %v594
    %v665 = vpop.permute.xlu0 %664
    %668 = vset.pattern.permute.xlu0 0
    %669 = vperm.xlu0 %668, %v595
    %v670 = vpop.permute.xlu0 %669
    %673 = vset.pattern.permute.xlu0 0
    %674 = vperm.xlu0 %673, %v596
    %v675 = vpop.permute.xlu0 %674
    %678 = vset.pattern.permute.xlu0 0
    %679 = vperm.xlu0 %678, %v597
    %v680 = vpop.permute.xlu0 %679
    %683 = vset.pattern.permute.xlu0 0
    %684 = vperm.xlu0 %683, %v598
    %v685 = vpop.permute.xlu0 %684
    %688 = vset.pattern.permute.xlu0 0
    %689 = vperm.xlu0 %688, %v599
    %v690 = vpop.permute.xlu0 %689
    %693 = vset.pattern.permute.xlu0 0
    %694 = vperm.xlu0 %693, %v600
    %v695 = vpop.permute.xlu0 %694
    %698 = vset.pattern.permute.xlu0 0
    %699 = vperm.xlu0 %698, %v601
    %v700 = vpop.permute.xlu0 %699
    %703 = vset.pattern.permute.xlu0 0
    %704 = vperm.xlu0 %703, %v602
    %v705 = vpop.permute.xlu0 %704
    %708 = vset.pattern.permute.xlu0 0
    %709 = vperm.xlu0 %708, %v603
    %v710 = vpop.permute.xlu0 %709
    %713 = vset.pattern.permute.xlu0 0
    %714 = vperm.xlu0 %713, %v604
    %v715 = vpop.permute.xlu0 %714
    %718 = vset.pattern.permute.xlu0 0
    %719 = vperm.xlu0 %718, %v605
    %v720 = vpop.permute.xlu0 %719
    %723 = vset.pattern.permute.xlu0 0
    %724 = vperm.xlu0 %723, %v606
    %v725 = vpop.permute.xlu0 %724
    %728 = vset.pattern.permute.xlu0 0
    %729 = vperm.xlu0 %728, %v607
    %v730 = vpop.permute.xlu0 %729
    %733 = vset.pattern.permute.xlu0 0
    %734 = vperm.xlu0 %733, %v608
    %v735 = vpop.permute.xlu0 %734
    %738 = vset.pattern.permute.xlu0 0
    %739 = vperm.xlu0 %738, %v609
    %v740 = vpop.permute.xlu0 %739
    %743 = vset.pattern.permute.xlu0 0
    %744 = vperm.xlu0 %743, %v610
    %v745 = vpop.permute.xlu0 %744
    %748 = vset.pattern.permute.xlu0 0
    %749 = vperm.xlu0 %748, %v611
    %v750 = vpop.permute.xlu0 %749
    %753 = vset.pattern.permute.xlu0 0
    %754 = vperm.xlu0 %753, %v612
    %v755 = vpop.permute.xlu0 %754
    %758 = vset.pattern.permute.xlu0 0
    %759 = vperm.xlu0 %758, %v613
    %v760 = vpop.permute.xlu0 %759
    %763 = vset.pattern.permute.xlu0 0
    %764 = vperm.xlu0 %763, %v614
    %v765 = vpop.permute.xlu0 %764
    %768 = vset.pattern.permute.xlu0 0
    %769 = vperm.xlu0 %768, %v615
    %v770 = vpop.permute.xlu0 %769
    %773 = vset.pattern.permute.xlu0 0
    %774 = vperm.xlu0 %773, %v616
    %v775 = vpop.permute.xlu0 %774
    %v777 = vmul.f32 %v553, %v620
    %v778 = vmul.f32 %v554, %v625
    %v779 = vmul.f32 %v555, %v630
    %v780 = vmul.f32 %v556, %v635
    %v781 = vmul.f32 %v557, %v640
    %v782 = vmul.f32 %v558, %v645
    %v783 = vmul.f32 %v559, %v650
    %v784 = vmul.f32 %v560, %v655
    %v785 = vmul.f32 %v561, %v660
    %v786 = vmul.f32 %v562, %v665
    %v787 = vmul.f32 %v563, %v670
    %v788 = vmul.f32 %v564, %v675
    %v789 = vmul.f32 %v565, %v680
    %v790 = vmul.f32 %v566, %v685
    %v791 = vmul.f32 %v567, %v690
    %v792 = vmul.f32 %v568, %v695
    %v793 = vmul.f32 %v569, %v700
    %v794 = vmul.f32 %v570, %v705
    %v795 = vmul.f32 %v571, %v710
    %v796 = vmul.f32 %v572, %v715
    %v797 = vmul.f32 %v573, %v720
    %v798 = vmul.f32 %v574, %v725
    %v799 = vmul.f32 %v575, %v730
    %v800 = vmul.f32 %v576, %v735
    %v801 = vmul.f32 %v577, %v740
    %v802 = vmul.f32 %v578, %v745
    %v803 = vmul.f32 %v579, %v750
    %v804 = vmul.f32 %v580, %v755
    %v805 = vmul.f32 %v581, %v760
    %v806 = vmul.f32 %v582, %v765
    %v807 = vmul.f32 %v583, %v770
    %v808 = vmul.f32 %v584, %v775
    %v809 = vadd.f32 %v777, %v778
    %v810 = vadd.f32 %v809, %v779
    %v811 = vadd.f32 %v810, %v780
    %v812 = vadd.f32 %v811, %v781
    %v813 = vadd.f32 %v812, %v782
    %v814 = vadd.f32 %v813, %v783
    %v815 = vadd.f32 %v814, %v784
    %v816 = vadd.f32 %v815, %v785
    %v817 = vadd.f32 %v816, %v786
    %v818 = vadd.f32 %v817, %v787
    %v819 = vadd.f32 %v818, %v788
    %v820 = vadd.f32 %v819, %v789
    %v821 = vadd.f32 %v820, %v790
    %v822 = vadd.f32 %v821, %v791
    %v823 = vadd.f32 %v822, %v792
    %v824 = vadd.f32 %v823, %v793
    %v825 = vadd.f32 %v824, %v794
    %v826 = vadd.f32 %v825, %v795
    %v827 = vadd.f32 %v826, %v796
    %v828 = vadd.f32 %v827, %v797
    %v829 = vadd.f32 %v828, %v798
    %v830 = vadd.f32 %v829, %v799
    %v831 = vadd.f32 %v830, %v800
    %v832 = vadd.f32 %v831, %v801
    %v833 = vadd.f32 %v832, %v802
    %v834 = vadd.f32 %v833, %v803
    %v835 = vadd.f32 %v834, %v804
    %v836 = vadd.f32 %v835, %v805
    %v837 = vadd.f32 %v836, %v806
    %v838 = vadd.f32 %v837, %v807
    %v839 = vadd.f32 %v838, %v808
    %v840 = vrot.slane %v839, 4
    %v841 = vadd.f32 %v839, %v840
    %v842 = vrot.slane %v841, 2
    %v843 = vadd.f32 %v841, %v842
    %v844 = vrot.slane %v843, 1
    %v845 = vadd.f32 %v843, %v844
    %s846 = sld [smem:[#allocation2]]
    %v847 = vstv %s846
    %v848 = vadd.f32 %v845, %v847
    %849 = vst [vmem:[#allocation3] sm:$0x1] %v848
    // Predicated region
    $region22: #{tpu_custom_call.1} parent=1 // pred_check
      _
    $region23: #{tpu_custom_call.1} parent=1 // pred_check_branch
      %851 = sbr.rel (0) target = $region25
    $region24: #{tpu_custom_call.1} parent=1 // pred_region
      %s853 = ssub.s32 16, 16
      %854 = vsyncadd [#allocation4], %s853
      %s856 = sshll.u32 [#allocation3], 4
      %s857 = int_to_ptr.vmem [resolvable:$true] %s856
      %859 = dma.vmem_to_hbm [thread:$0]  %s857, 16, %s5, [#allocation4]
    $region25: #{tpu_custom_call.1} parent=1 // pred_fallthru
      _
    // Predicated region
    $region26: #{tpu_custom_call.1} parent=1 // pred_check
      _
    $region27: #{tpu_custom_call.1} parent=1 // pred_check_branch
      %861 = sbr.rel (0) target = $region29
    $region28: #{tpu_custom_call.1} parent=1 // pred_region
      %862 = dma.done [#allocation4], 16
    $region29: #{tpu_custom_call.1} parent=1 // pred_fallthru
      _
    %863 = vsyncpa [#allocation4], 1

</llo_original>
